<compile_context>
chip_gen: v5e
topology: v5e:2x2
jax: 0.10.0
libtpu: 0.0.40
codegen_flags: <defaults>
</compile_context>

<pallas_src>
import functools

import jax
import jax.numpy as jnp
from jax import lax
from jax.experimental import pallas as pl
from jax.experimental.pallas import tpu as pltpu

_NEG_LARGE = -1e30  # finite "-inf" for masked lanes (avoids inf-inf NaNs)


def _round_up(x, m):
    return (x + m - 1) // m * m


def _bigram_logits_kernel(idx_ref, table_ref, logits_ref, *, tile_n):
    """Inference path: gather TILE_N embedding rows, no cross-entropy."""
    base = pl.program_id(0) * tile_n
    for r in range(tile_n):                       # static unroll, dynamic tok
        tok = idx_ref[base + r]                   # SMEM scalar read
        logits_ref[pl.ds(r, 1), :] = table_ref[pl.ds(tok, 1), :]


def _bigram_ce_kernel(idx_ref, tgt_ref, table_ref, logits_ref, loss_ref, *,
                      tile_n, vocab, n_rows):
    """Training path: gather TILE_N rows + fused mean cross-entropy."""
    step = pl.program_id(0)

    @pl.when(step == 0)
    def _init():
        loss_ref[...] = jnp.zeros_like(loss_ref)

    base = step * tile_n

    # Row gather from the resident table + collect targets into a (tile_n, 1)
    # vector without materializing any (N, V) one-hot.
    sub = lax.broadcasted_iota(jnp.int32, (tile_n, 1), 0)
    tgt_col = jnp.zeros((tile_n, 1), jnp.int32)
    for r in range(tile_n):
        tok = idx_ref[base + r]                   # SMEM scalar read
        logits_ref[pl.ds(r, 1), :] = table_ref[pl.ds(tok, 1), :]
        tgt_col = jnp.where(sub == r, tgt_ref[base + r], tgt_col)

    # Vectorized, numerically stable cross-entropy over the tile.
    logits = logits_ref[...]                                   # (tile_n, Vpad)
    col = lax.broadcasted_iota(jnp.int32, logits.shape, 1)
    masked = jnp.where(col < vocab, logits, _NEG_LARGE)        # mask pad lanes
    m = jnp.max(masked, axis=-1, keepdims=True)                # (tile_n, 1)
    lse = jnp.log(jnp.sum(jnp.exp(masked - m), axis=-1, keepdims=True)) + m
    tgt_logit = jnp.sum(jnp.where(col == tgt_col, logits, 0.0),
                        axis=-1, keepdims=True)                # (tile_n, 1)

    row_ids = base + sub                                       # (tile_n, 1)
    per_row = jnp.where(row_ids < n_rows, lse - tgt_logit, 0.0)
    loss_ref[...] += jnp.sum(per_row, axis=0, keepdims=True)   # (1, 1)

    @pl.when(step == pl.num_programs(0) - 1)
    def _finalize():
        loss_ref[...] = loss_ref[...] * jnp.float32(1.0 / n_rows)


def bigram_forward(idx, table, targets=None, *, max_tile_rows=64):
    """Pallas equivalent of BigramLanguageModel.forward."""
    B, T = idx.shape
    V = table.shape[0]
    N = B * T

    v_rows = _round_up(V, 8)          # sublane-friendly table rows
    v_pad = _round_up(V, 128)         # lane-dense logits columns
    tile_n = min(max_tile_rows, _round_up(N, 8))
    n_pad = _round_up(N, tile_n)
    grid = (n_pad // tile_n,)

    # Zero-pad the table to (v_rows, v_pad); padded columns are masked in-kernel.
    table_p = jnp.zeros((v_rows, v_pad), jnp.float32)
    table_p = table_p.at[:V, :V].set(table.astype(jnp.float32))

    # Token ids as 1-D SMEM scalar-prefetch arrays (clamped for gather safety).
    idx_flat = jnp.clip(idx.reshape(-1).astype(jnp.int32), 0, V - 1)
    idx_flat = jnp.pad(idx_flat, (0, n_pad - N))

    table_spec = pl.BlockSpec((v_rows, v_pad), lambda i, *_: (0, 0))
    logits_spec = pl.BlockSpec((tile_n, v_pad), lambda i, *_: (i, 0))

    if targets is None:
        logits_p = pl.pallas_call(
            functools.partial(_bigram_logits_kernel, tile_n=tile_n),
            out_shape=jax.ShapeDtypeStruct((n_pad, v_pad), jnp.float32),
            grid_spec=pltpu.PrefetchScalarGridSpec(
                num_scalar_prefetch=1,
                grid=grid,
                in_specs=[table_spec],
                out_specs=logits_spec,
            ),
            compiler_params=pltpu.CompilerParams(
                dimension_semantics=("parallel",)),
        )(idx_flat, table_p)
        # PyTorch returns the un-flattened (B, T, V) logits in this branch.
        return logits_p[:N, :V].reshape(B, T, V), None

    tgt_flat = jnp.clip(targets.reshape(-1).astype(jnp.int32), 0, V - 1)
    tgt_flat = jnp.pad(tgt_flat, (0, n_pad - N))

    logits_p, loss = pl.pallas_call(
        functools.partial(_bigram_ce_kernel,
                          tile_n=tile_n, vocab=V, n_rows=N),
        out_shape=(
            jax.ShapeDtypeStruct((n_pad, v_pad), jnp.float32),
            jax.ShapeDtypeStruct((1, 1), jnp.float32),
        ),
        grid_spec=pltpu.PrefetchScalarGridSpec(
            num_scalar_prefetch=2,
            grid=grid,
            in_specs=[table_spec],
            out_specs=(
                logits_spec,
                pl.BlockSpec((1, 1), lambda i, *_: (0, 0)),  # resident accum
            ),
        ),
        compiler_params=pltpu.CompilerParams(
            dimension_semantics=("arbitrary",)),  # loss accumulated over grid
    )(idx_flat, tgt_flat, table_p)

    # PyTorch returns the flattened (B*T, V) view when targets are given.
    return logits_p[:N, :V], loss[0, 0]


def _reference_forward(idx, table, targets):
    """Pure-JAX reference for correctness checking."""
    B, T = idx.shape
    V = table.shape[0]
    logits = table[idx]                                  # (B, T, V) gather
    logits2 = logits.reshape(B * T, V)
    tgt = targets.reshape(B * T)
    lse = jax.nn.logsumexp(logits2, axis=-1)
    tgt_logit = jnp.take_along_axis(logits2, tgt[:, None], axis=-1)[:, 0]
    loss = jnp.mean(lse - tgt_logit)
    return logits2, loss


if __name__ == "__main__":
    key = jax.random.PRNGKey(0)
    k_table, k_idx, k_tgt = jax.random.split(key, 3)

    vocab_size = 64
    B, T = 2, 8

    # nn.Embedding default init ~ N(0, 1)
    table = jax.random.normal(k_table, (vocab_size, vocab_size), jnp.float32)
    idx = jax.random.randint(k_idx, (B, T), 0, vocab_size, jnp.int32)
    targets = jax.random.randint(k_tgt, (B, T), 0, vocab_size, jnp.int32)

    # With targets: logits (B*T, V) + scalar loss.
    logits, loss = bigram_forward(idx, table, targets)
    jax.block_until_ready((logits, loss))

    # Without targets: logits (B, T, V), loss None.
    logits_nt, loss_nt = bigram_forward(idx, table, None)
    jax.block_until_ready(logits_nt)
    assert loss_nt is None
    assert logits_nt.shape == (B, T, vocab_size)

    # Correctness check against pure-JAX reference.
    ref_logits, ref_loss = _reference_forward(idx, table, targets)
    assert logits.shape == (B * T, vocab_size)
    assert jnp.allclose(logits, ref_logits, atol=1e-5, rtol=1e-5)
    assert jnp.allclose(loss, ref_loss, atol=1e-5, rtol=1e-5)
    assert jnp.allclose(logits_nt.reshape(B * T, vocab_size), ref_logits,
                        atol=1e-5, rtol=1e-5)

    # TODO(synk): generate() (autoregressive multinomial sampling loop) is
    # host-side control flow and is not implemented as a kernel.

    print("KERNEL_OK")
</pallas_src>

<mosaic_0001>
module attributes {stable_mosaic.version = 11 : i64} {
  func.func @_bigram_ce_kernel(%arg0: i32, %arg1: memref<16xi32, #tpu.memory_space<smem>>, %arg2: memref<16xi32, #tpu.memory_space<smem>>, %arg3: memref<64x128xf32, #tpu.memory_space<vmem>>, %arg4: memref<16x128xf32, #tpu.memory_space<vmem>>, %arg5: memref<1x1xf32, #tpu.memory_space<vmem>>) attributes {dimension_semantics = [#tpu.dimension_semantics<arbitrary>], iteration_bounds = array<i64: 1>, scalar_prefetch = 2 : i64, scratch_operands = 0 : i64, tpu.core_type = #tpu.core_type<tc>, window_params = [{pipeline_mode = #tpu.pipeline_mode<synchronous>, transform_indices = @transform_0, window_bounds = array<i64: 64, 128>}, {transform_indices = @transform_1, window_bounds = array<i64: 16, 128>}, {pipeline_mode = #tpu.pipeline_mode<synchronous>, transform_indices = @transform_2, window_bounds = array<i64: 1, 1>}]} {
    %c0_i32 = arith.constant 0 : i32
    %0 = arith.cmpi eq, %arg0, %c0_i32 : i32
    %1 = arith.extui %0 : i1 to i32
    %c0_i32_0 = arith.constant 0 : i32
    %2 = arith.cmpi ne, %1, %c0_i32_0 : i32
    scf.if %2 {
      %cst_82 = arith.constant 0.000000e+00 : f32
      %250 = vector.broadcast %cst_82 : f32 to vector<1x1xf32>
      %c0_83 = arith.constant 0 : index
      %c0_84 = arith.constant 0 : index
      %251 = vector.load %arg5[%c0_83, %c0_84] : memref<1x1xf32, #tpu.memory_space<vmem>>, vector<1x1xf32>
      tpu.vector_store %arg5[%c0_83, %c0_84], %250 {strides = array<i32>} : memref<1x1xf32, #tpu.memory_space<vmem>>, vector<1x1xf32>,
    } else {
    }
    %c16_i32 = arith.constant 16 : i32
    %3 = arith.muli %arg0, %c16_i32 : i32
    %4 = tpu.iota {dimensions = array<i32: 0>} : vector<16x1xi32>
    %c0_i32_1 = arith.constant 0 : i32
    %5 = vector.broadcast %c0_i32_1 : i32 to vector<16x1xi32>
    %c0_i32_2 = arith.constant 0 : i32
    %6 = arith.addi %3, %c0_i32_2 : i32
    %7 = arith.index_cast %6 : i32 to index
    %8 = memref.load %arg1[%7] : memref<16xi32, #tpu.memory_space<smem>>
    %9 = arith.index_cast %8 : i32 to index
    %c0 = arith.constant 0 : index
    %10 = vector.load %arg3[%9, %c0] : memref<64x128xf32, #tpu.memory_space<vmem>>, vector<1x128xf32>
    %c0_3 = arith.constant 0 : index
    %c0_4 = arith.constant 0 : index
    %11 = vector.load %arg4[%c0_3, %c0_4] : memref<16x128xf32, #tpu.memory_space<vmem>>, vector<1x128xf32>
    tpu.vector_store %arg4[%c0_3, %c0_4], %10 {strides = array<i32>} : memref<16x128xf32, #tpu.memory_space<vmem>>, vector<1x128xf32>,
    %c0_i32_5 = arith.constant 0 : i32
    %12 = vector.broadcast %c0_i32_5 : i32 to vector<16x1xi32>
    %13 = arith.cmpi eq, %4, %12 : vector<16x1xi32>
    %c0_i32_6 = arith.constant 0 : i32
    %14 = arith.addi %3, %c0_i32_6 : i32
    %15 = arith.index_cast %14 : i32 to index
    %16 = memref.load %arg2[%15] : memref<16xi32, #tpu.memory_space<smem>>
    %17 = vector.broadcast %16 : i32 to vector<16x1xi32>
    %18 = arith.select %13, %17, %5 : vector<16x1xi1>, vector<16x1xi32>
    %c1_i32 = arith.constant 1 : i32
    %19 = arith.addi %3, %c1_i32 : i32
    %20 = arith.index_cast %19 : i32 to index
    %21 = memref.load %arg1[%20] : memref<16xi32, #tpu.memory_space<smem>>
    %22 = arith.index_cast %21 : i32 to index
    %c0_7 = arith.constant 0 : index
    %23 = vector.load %arg3[%22, %c0_7] : memref<64x128xf32, #tpu.memory_space<vmem>>, vector<1x128xf32>
    %c1 = arith.constant 1 : index
    %c0_8 = arith.constant 0 : index
    %24 = vector.load %arg4[%c1, %c0_8] : memref<16x128xf32, #tpu.memory_space<vmem>>, vector<1x128xf32>
    tpu.vector_store %arg4[%c1, %c0_8], %23 {strides = array<i32>} : memref<16x128xf32, #tpu.memory_space<vmem>>, vector<1x128xf32>,
    %c1_i32_9 = arith.constant 1 : i32
    %25 = vector.broadcast %c1_i32_9 : i32 to vector<16x1xi32>
    %26 = arith.cmpi eq, %4, %25 : vector<16x1xi32>
    %c1_i32_10 = arith.constant 1 : i32
    %27 = arith.addi %3, %c1_i32_10 : i32
    %28 = arith.index_cast %27 : i32 to index
    %29 = memref.load %arg2[%28] : memref<16xi32, #tpu.memory_space<smem>>
    %30 = vector.broadcast %29 : i32 to vector<16x1xi32>
    %31 = arith.select %26, %30, %18 : vector<16x1xi1>, vector<16x1xi32>
    %c2_i32 = arith.constant 2 : i32
    %32 = arith.addi %3, %c2_i32 : i32
    %33 = arith.index_cast %32 : i32 to index
    %34 = memref.load %arg1[%33] : memref<16xi32, #tpu.memory_space<smem>>
    %35 = arith.index_cast %34 : i32 to index
    %c0_11 = arith.constant 0 : index
    %36 = vector.load %arg3[%35, %c0_11] : memref<64x128xf32, #tpu.memory_space<vmem>>, vector<1x128xf32>
    %c2 = arith.constant 2 : index
    %c0_12 = arith.constant 0 : index
    %37 = vector.load %arg4[%c2, %c0_12] : memref<16x128xf32, #tpu.memory_space<vmem>>, vector<1x128xf32>
    tpu.vector_store %arg4[%c2, %c0_12], %36 {strides = array<i32>} : memref<16x128xf32, #tpu.memory_space<vmem>>, vector<1x128xf32>,
    %c2_i32_13 = arith.constant 2 : i32
    %38 = vector.broadcast %c2_i32_13 : i32 to vector<16x1xi32>
    %39 = arith.cmpi eq, %4, %38 : vector<16x1xi32>
    %c2_i32_14 = arith.constant 2 : i32
    %40 = arith.addi %3, %c2_i32_14 : i32
    %41 = arith.index_cast %40 : i32 to index
    %42 = memref.load %arg2[%41] : memref<16xi32, #tpu.memory_space<smem>>
    %43 = vector.broadcast %42 : i32 to vector<16x1xi32>
    %44 = arith.select %39, %43, %31 : vector<16x1xi1>, vector<16x1xi32>
    %c3_i32 = arith.constant 3 : i32
    %45 = arith.addi %3, %c3_i32 : i32
    %46 = arith.index_cast %45 : i32 to index
    %47 = memref.load %arg1[%46] : memref<16xi32, #tpu.memory_space<smem>>
    %48 = arith.index_cast %47 : i32 to index
    %c0_15 = arith.constant 0 : index
    %49 = vector.load %arg3[%48, %c0_15] : memref<64x128xf32, #tpu.memory_space<vmem>>, vector<1x128xf32>
    %c3 = arith.constant 3 : index
    %c0_16 = arith.constant 0 : index
    %50 = vector.load %arg4[%c3, %c0_16] : memref<16x128xf32, #tpu.memory_space<vmem>>, vector<1x128xf32>
    tpu.vector_store %arg4[%c3, %c0_16], %49 {strides = array<i32>} : memref<16x128xf32, #tpu.memory_space<vmem>>, vector<1x128xf32>,
    %c3_i32_17 = arith.constant 3 : i32
    %51 = vector.broadcast %c3_i32_17 : i32 to vector<16x1xi32>
    %52 = arith.cmpi eq, %4, %51 : vector<16x1xi32>
    %c3_i32_18 = arith.constant 3 : i32
    %53 = arith.addi %3, %c3_i32_18 : i32
    %54 = arith.index_cast %53 : i32 to index
    %55 = memref.load %arg2[%54] : memref<16xi32, #tpu.memory_space<smem>>
    %56 = vector.broadcast %55 : i32 to vector<16x1xi32>
    %57 = arith.select %52, %56, %44 : vector<16x1xi1>, vector<16x1xi32>
    %c4_i32 = arith.constant 4 : i32
    %58 = arith.addi %3, %c4_i32 : i32
    %59 = arith.index_cast %58 : i32 to index
    %60 = memref.load %arg1[%59] : memref<16xi32, #tpu.memory_space<smem>>
    %61 = arith.index_cast %60 : i32 to index
    %c0_19 = arith.constant 0 : index
    %62 = vector.load %arg3[%61, %c0_19] : memref<64x128xf32, #tpu.memory_space<vmem>>, vector<1x128xf32>
    %c4 = arith.constant 4 : index
    %c0_20 = arith.constant 0 : index
    %63 = vector.load %arg4[%c4, %c0_20] : memref<16x128xf32, #tpu.memory_space<vmem>>, vector<1x128xf32>
    tpu.vector_store %arg4[%c4, %c0_20], %62 {strides = array<i32>} : memref<16x128xf32, #tpu.memory_space<vmem>>, vector<1x128xf32>,
    %c4_i32_21 = arith.constant 4 : i32
    %64 = vector.broadcast %c4_i32_21 : i32 to vector<16x1xi32>
    %65 = arith.cmpi eq, %4, %64 : vector<16x1xi32>
    %c4_i32_22 = arith.constant 4 : i32
    %66 = arith.addi %3, %c4_i32_22 : i32
    %67 = arith.index_cast %66 : i32 to index
    %68 = memref.load %arg2[%67] : memref<16xi32, #tpu.memory_space<smem>>
    %69 = vector.broadcast %68 : i32 to vector<16x1xi32>
    %70 = arith.select %65, %69, %57 : vector<16x1xi1>, vector<16x1xi32>
    %c5_i32 = arith.constant 5 : i32
    %71 = arith.addi %3, %c5_i32 : i32
    %72 = arith.index_cast %71 : i32 to index
    %73 = memref.load %arg1[%72] : memref<16xi32, #tpu.memory_space<smem>>
    %74 = arith.index_cast %73 : i32 to index
    %c0_23 = arith.constant 0 : index
    %75 = vector.load %arg3[%74, %c0_23] : memref<64x128xf32, #tpu.memory_space<vmem>>, vector<1x128xf32>
    %c5 = arith.constant 5 : index
    %c0_24 = arith.constant 0 : index
    %76 = vector.load %arg4[%c5, %c0_24] : memref<16x128xf32, #tpu.memory_space<vmem>>, vector<1x128xf32>
    tpu.vector_store %arg4[%c5, %c0_24], %75 {strides = array<i32>} : memref<16x128xf32, #tpu.memory_space<vmem>>, vector<1x128xf32>,
    %c5_i32_25 = arith.constant 5 : i32
    %77 = vector.broadcast %c5_i32_25 : i32 to vector<16x1xi32>
    %78 = arith.cmpi eq, %4, %77 : vector<16x1xi32>
    %c5_i32_26 = arith.constant 5 : i32
    %79 = arith.addi %3, %c5_i32_26 : i32
    %80 = arith.index_cast %79 : i32 to index
    %81 = memref.load %arg2[%80] : memref<16xi32, #tpu.memory_space<smem>>
    %82 = vector.broadcast %81 : i32 to vector<16x1xi32>
    %83 = arith.select %78, %82, %70 : vector<16x1xi1>, vector<16x1xi32>
    %c6_i32 = arith.constant 6 : i32
    %84 = arith.addi %3, %c6_i32 : i32
    %85 = arith.index_cast %84 : i32 to index
    %86 = memref.load %arg1[%85] : memref<16xi32, #tpu.memory_space<smem>>
    %87 = arith.index_cast %86 : i32 to index
    %c0_27 = arith.constant 0 : index
    %88 = vector.load %arg3[%87, %c0_27] : memref<64x128xf32, #tpu.memory_space<vmem>>, vector<1x128xf32>
    %c6 = arith.constant 6 : index
    %c0_28 = arith.constant 0 : index
    %89 = vector.load %arg4[%c6, %c0_28] : memref<16x128xf32, #tpu.memory_space<vmem>>, vector<1x128xf32>
    tpu.vector_store %arg4[%c6, %c0_28], %88 {strides = array<i32>} : memref<16x128xf32, #tpu.memory_space<vmem>>, vector<1x128xf32>,
    %c6_i32_29 = arith.constant 6 : i32
    %90 = vector.broadcast %c6_i32_29 : i32 to vector<16x1xi32>
    %91 = arith.cmpi eq, %4, %90 : vector<16x1xi32>
    %c6_i32_30 = arith.constant 6 : i32
    %92 = arith.addi %3, %c6_i32_30 : i32
    %93 = arith.index_cast %92 : i32 to index
    %94 = memref.load %arg2[%93] : memref<16xi32, #tpu.memory_space<smem>>
    %95 = vector.broadcast %94 : i32 to vector<16x1xi32>
    %96 = arith.select %91, %95, %83 : vector<16x1xi1>, vector<16x1xi32>
    %c7_i32 = arith.constant 7 : i32
    %97 = arith.addi %3, %c7_i32 : i32
    %98 = arith.index_cast %97 : i32 to index
    %99 = memref.load %arg1[%98] : memref<16xi32, #tpu.memory_space<smem>>
    %100 = arith.index_cast %99 : i32 to index
    %c0_31 = arith.constant 0 : index
    %101 = vector.load %arg3[%100, %c0_31] : memref<64x128xf32, #tpu.memory_space<vmem>>, vector<1x128xf32>
    %c7 = arith.constant 7 : index
    %c0_32 = arith.constant 0 : index
    %102 = vector.load %arg4[%c7, %c0_32] : memref<16x128xf32, #tpu.memory_space<vmem>>, vector<1x128xf32>
    tpu.vector_store %arg4[%c7, %c0_32], %101 {strides = array<i32>} : memref<16x128xf32, #tpu.memory_space<vmem>>, vector<1x128xf32>,
    %c7_i32_33 = arith.constant 7 : i32
    %103 = vector.broadcast %c7_i32_33 : i32 to vector<16x1xi32>
    %104 = arith.cmpi eq, %4, %103 : vector<16x1xi32>
    %c7_i32_34 = arith.constant 7 : i32
    %105 = arith.addi %3, %c7_i32_34 : i32
    %106 = arith.index_cast %105 : i32 to index
    %107 = memref.load %arg2[%106] : memref<16xi32, #tpu.memory_space<smem>>
    %108 = vector.broadcast %107 : i32 to vector<16x1xi32>
    %109 = arith.select %104, %108, %96 : vector<16x1xi1>, vector<16x1xi32>
    %c8_i32 = arith.constant 8 : i32
    %110 = arith.addi %3, %c8_i32 : i32
    %111 = arith.index_cast %110 : i32 to index
    %112 = memref.load %arg1[%111] : memref<16xi32, #tpu.memory_space<smem>>
    %113 = arith.index_cast %112 : i32 to index
    %c0_35 = arith.constant 0 : index
    %114 = vector.load %arg3[%113, %c0_35] : memref<64x128xf32, #tpu.memory_space<vmem>>, vector<1x128xf32>
    %c8 = arith.constant 8 : index
    %c0_36 = arith.constant 0 : index
    %115 = vector.load %arg4[%c8, %c0_36] : memref<16x128xf32, #tpu.memory_space<vmem>>, vector<1x128xf32>
    tpu.vector_store %arg4[%c8, %c0_36], %114 {strides = array<i32>} : memref<16x128xf32, #tpu.memory_space<vmem>>, vector<1x128xf32>,
    %c8_i32_37 = arith.constant 8 : i32
    %116 = vector.broadcast %c8_i32_37 : i32 to vector<16x1xi32>
    %117 = arith.cmpi eq, %4, %116 : vector<16x1xi32>
    %c8_i32_38 = arith.constant 8 : i32
    %118 = arith.addi %3, %c8_i32_38 : i32
    %119 = arith.index_cast %118 : i32 to index
    %120 = memref.load %arg2[%119] : memref<16xi32, #tpu.memory_space<smem>>
    %121 = vector.broadcast %120 : i32 to vector<16x1xi32>
    %122 = arith.select %117, %121, %109 : vector<16x1xi1>, vector<16x1xi32>
    %c9_i32 = arith.constant 9 : i32
    %123 = arith.addi %3, %c9_i32 : i32
    %124 = arith.index_cast %123 : i32 to index
    %125 = memref.load %arg1[%124] : memref<16xi32, #tpu.memory_space<smem>>
    %126 = arith.index_cast %125 : i32 to index
    %c0_39 = arith.constant 0 : index
    %127 = vector.load %arg3[%126, %c0_39] : memref<64x128xf32, #tpu.memory_space<vmem>>, vector<1x128xf32>
    %c9 = arith.constant 9 : index
    %c0_40 = arith.constant 0 : index
    %128 = vector.load %arg4[%c9, %c0_40] : memref<16x128xf32, #tpu.memory_space<vmem>>, vector<1x128xf32>
    tpu.vector_store %arg4[%c9, %c0_40], %127 {strides = array<i32>} : memref<16x128xf32, #tpu.memory_space<vmem>>, vector<1x128xf32>,
    %c9_i32_41 = arith.constant 9 : i32
    %129 = vector.broadcast %c9_i32_41 : i32 to vector<16x1xi32>
    %130 = arith.cmpi eq, %4, %129 : vector<16x1xi32>
    %c9_i32_42 = arith.constant 9 : i32
    %131 = arith.addi %3, %c9_i32_42 : i32
    %132 = arith.index_cast %131 : i32 to index
    %133 = memref.load %arg2[%132] : memref<16xi32, #tpu.memory_space<smem>>
    %134 = vector.broadcast %133 : i32 to vector<16x1xi32>
    %135 = arith.select %130, %134, %122 : vector<16x1xi1>, vector<16x1xi32>
    %c10_i32 = arith.constant 10 : i32
    %136 = arith.addi %3, %c10_i32 : i32
    %137 = arith.index_cast %136 : i32 to index
    %138 = memref.load %arg1[%137] : memref<16xi32, #tpu.memory_space<smem>>
    %139 = arith.index_cast %138 : i32 to index
    %c0_43 = arith.constant 0 : index
    %140 = vector.load %arg3[%139, %c0_43] : memref<64x128xf32, #tpu.memory_space<vmem>>, vector<1x128xf32>
    %c10 = arith.constant 10 : index
    %c0_44 = arith.constant 0 : index
    %141 = vector.load %arg4[%c10, %c0_44] : memref<16x128xf32, #tpu.memory_space<vmem>>, vector<1x128xf32>
    tpu.vector_store %arg4[%c10, %c0_44], %140 {strides = array<i32>} : memref<16x128xf32, #tpu.memory_space<vmem>>, vector<1x128xf32>,
    %c10_i32_45 = arith.constant 10 : i32
    %142 = vector.broadcast %c10_i32_45 : i32 to vector<16x1xi32>
    %143 = arith.cmpi eq, %4, %142 : vector<16x1xi32>
    %c10_i32_46 = arith.constant 10 : i32
    %144 = arith.addi %3, %c10_i32_46 : i32
    %145 = arith.index_cast %144 : i32 to index
    %146 = memref.load %arg2[%145] : memref<16xi32, #tpu.memory_space<smem>>
    %147 = vector.broadcast %146 : i32 to vector<16x1xi32>
    %148 = arith.select %143, %147, %135 : vector<16x1xi1>, vector<16x1xi32>
    %c11_i32 = arith.constant 11 : i32
    %149 = arith.addi %3, %c11_i32 : i32
    %150 = arith.index_cast %149 : i32 to index
    %151 = memref.load %arg1[%150] : memref<16xi32, #tpu.memory_space<smem>>
    %152 = arith.index_cast %151 : i32 to index
    %c0_47 = arith.constant 0 : index
    %153 = vector.load %arg3[%152, %c0_47] : memref<64x128xf32, #tpu.memory_space<vmem>>, vector<1x128xf32>
    %c11 = arith.constant 11 : index
    %c0_48 = arith.constant 0 : index
    %154 = vector.load %arg4[%c11, %c0_48] : memref<16x128xf32, #tpu.memory_space<vmem>>, vector<1x128xf32>
    tpu.vector_store %arg4[%c11, %c0_48], %153 {strides = array<i32>} : memref<16x128xf32, #tpu.memory_space<vmem>>, vector<1x128xf32>,
    %c11_i32_49 = arith.constant 11 : i32
    %155 = vector.broadcast %c11_i32_49 : i32 to vector<16x1xi32>
    %156 = arith.cmpi eq, %4, %155 : vector<16x1xi32>
    %c11_i32_50 = arith.constant 11 : i32
    %157 = arith.addi %3, %c11_i32_50 : i32
    %158 = arith.index_cast %157 : i32 to index
    %159 = memref.load %arg2[%158] : memref<16xi32, #tpu.memory_space<smem>>
    %160 = vector.broadcast %159 : i32 to vector<16x1xi32>
    %161 = arith.select %156, %160, %148 : vector<16x1xi1>, vector<16x1xi32>
    %c12_i32 = arith.constant 12 : i32
    %162 = arith.addi %3, %c12_i32 : i32
    %163 = arith.index_cast %162 : i32 to index
    %164 = memref.load %arg1[%163] : memref<16xi32, #tpu.memory_space<smem>>
    %165 = arith.index_cast %164 : i32 to index
    %c0_51 = arith.constant 0 : index
    %166 = vector.load %arg3[%165, %c0_51] : memref<64x128xf32, #tpu.memory_space<vmem>>, vector<1x128xf32>
    %c12 = arith.constant 12 : index
    %c0_52 = arith.constant 0 : index
    %167 = vector.load %arg4[%c12, %c0_52] : memref<16x128xf32, #tpu.memory_space<vmem>>, vector<1x128xf32>
    tpu.vector_store %arg4[%c12, %c0_52], %166 {strides = array<i32>} : memref<16x128xf32, #tpu.memory_space<vmem>>, vector<1x128xf32>,
    %c12_i32_53 = arith.constant 12 : i32
    %168 = vector.broadcast %c12_i32_53 : i32 to vector<16x1xi32>
    %169 = arith.cmpi eq, %4, %168 : vector<16x1xi32>
    %c12_i32_54 = arith.constant 12 : i32
    %170 = arith.addi %3, %c12_i32_54 : i32
    %171 = arith.index_cast %170 : i32 to index
    %172 = memref.load %arg2[%171] : memref<16xi32, #tpu.memory_space<smem>>
    %173 = vector.broadcast %172 : i32 to vector<16x1xi32>
    %174 = arith.select %169, %173, %161 : vector<16x1xi1>, vector<16x1xi32>
    %c13_i32 = arith.constant 13 : i32
    %175 = arith.addi %3, %c13_i32 : i32
    %176 = arith.index_cast %175 : i32 to index
    %177 = memref.load %arg1[%176] : memref<16xi32, #tpu.memory_space<smem>>
    %178 = arith.index_cast %177 : i32 to index
    %c0_55 = arith.constant 0 : index
    %179 = vector.load %arg3[%178, %c0_55] : memref<64x128xf32, #tpu.memory_space<vmem>>, vector<1x128xf32>
    %c13 = arith.constant 13 : index
    %c0_56 = arith.constant 0 : index
    %180 = vector.load %arg4[%c13, %c0_56] : memref<16x128xf32, #tpu.memory_space<vmem>>, vector<1x128xf32>
    tpu.vector_store %arg4[%c13, %c0_56], %179 {strides = array<i32>} : memref<16x128xf32, #tpu.memory_space<vmem>>, vector<1x128xf32>,
    %c13_i32_57 = arith.constant 13 : i32
    %181 = vector.broadcast %c13_i32_57 : i32 to vector<16x1xi32>
    %182 = arith.cmpi eq, %4, %181 : vector<16x1xi32>
    %c13_i32_58 = arith.constant 13 : i32
    %183 = arith.addi %3, %c13_i32_58 : i32
    %184 = arith.index_cast %183 : i32 to index
    %185 = memref.load %arg2[%184] : memref<16xi32, #tpu.memory_space<smem>>
    %186 = vector.broadcast %185 : i32 to vector<16x1xi32>
    %187 = arith.select %182, %186, %174 : vector<16x1xi1>, vector<16x1xi32>
    %c14_i32 = arith.constant 14 : i32
    %188 = arith.addi %3, %c14_i32 : i32
    %189 = arith.index_cast %188 : i32 to index
    %190 = memref.load %arg1[%189] : memref<16xi32, #tpu.memory_space<smem>>
    %191 = arith.index_cast %190 : i32 to index
    %c0_59 = arith.constant 0 : index
    %192 = vector.load %arg3[%191, %c0_59] : memref<64x128xf32, #tpu.memory_space<vmem>>, vector<1x128xf32>
    %c14 = arith.constant 14 : index
    %c0_60 = arith.constant 0 : index
    %193 = vector.load %arg4[%c14, %c0_60] : memref<16x128xf32, #tpu.memory_space<vmem>>, vector<1x128xf32>
    tpu.vector_store %arg4[%c14, %c0_60], %192 {strides = array<i32>} : memref<16x128xf32, #tpu.memory_space<vmem>>, vector<1x128xf32>,
    %c14_i32_61 = arith.constant 14 : i32
    %194 = vector.broadcast %c14_i32_61 : i32 to vector<16x1xi32>
    %195 = arith.cmpi eq, %4, %194 : vector<16x1xi32>
    %c14_i32_62 = arith.constant 14 : i32
    %196 = arith.addi %3, %c14_i32_62 : i32
    %197 = arith.index_cast %196 : i32 to index
    %198 = memref.load %arg2[%197] : memref<16xi32, #tpu.memory_space<smem>>
    %199 = vector.broadcast %198 : i32 to vector<16x1xi32>
    %200 = arith.select %195, %199, %187 : vector<16x1xi1>, vector<16x1xi32>
    %c15_i32 = arith.constant 15 : i32
    %201 = arith.addi %3, %c15_i32 : i32
    %202 = arith.index_cast %201 : i32 to index
    %203 = memref.load %arg1[%202] : memref<16xi32, #tpu.memory_space<smem>>
    %204 = arith.index_cast %203 : i32 to index
    %c0_63 = arith.constant 0 : index
    %205 = vector.load %arg3[%204, %c0_63] : memref<64x128xf32, #tpu.memory_space<vmem>>, vector<1x128xf32>
    %c15 = arith.constant 15 : index
    %c0_64 = arith.constant 0 : index
    %206 = vector.load %arg4[%c15, %c0_64] : memref<16x128xf32, #tpu.memory_space<vmem>>, vector<1x128xf32>
    tpu.vector_store %arg4[%c15, %c0_64], %205 {strides = array<i32>} : memref<16x128xf32, #tpu.memory_space<vmem>>, vector<1x128xf32>,
    %c15_i32_65 = arith.constant 15 : i32
    %207 = vector.broadcast %c15_i32_65 : i32 to vector<16x1xi32>
    %208 = arith.cmpi eq, %4, %207 : vector<16x1xi32>
    %c15_i32_66 = arith.constant 15 : i32
    %209 = arith.addi %3, %c15_i32_66 : i32
    %210 = arith.index_cast %209 : i32 to index
    %211 = memref.load %arg2[%210] : memref<16xi32, #tpu.memory_space<smem>>
    %212 = vector.broadcast %211 : i32 to vector<16x1xi32>
    %213 = arith.select %208, %212, %200 : vector<16x1xi1>, vector<16x1xi32>
    %c0_67 = arith.constant 0 : index
    %c0_68 = arith.constant 0 : index
    %214 = vector.load %arg4[%c0_67, %c0_68] : memref<16x128xf32, #tpu.memory_space<vmem>>, vector<16x128xf32>
    %215 = tpu.iota {dimensions = array<i32: 1>} : vector<16x128xi32>
    %c64_i32 = arith.constant 64 : i32
    %216 = vector.broadcast %c64_i32 : i32 to vector<16x128xi32>
    %217 = arith.cmpi slt, %215, %216 : vector<16x128xi32>
    %cst = arith.constant -1.000000e+30 : f32
    %218 = vector.broadcast %cst : f32 to vector<16x128xf32>
    %219 = arith.select %217, %214, %218 : vector<16x128xi1>, vector<16x128xf32>
    %cst_69 = arith.constant dense<0xFF800000> : vector<16xf32>
    %220 = vector.multi_reduction <maximumf>, %219, %cst_69 [1] : vector<16x128xf32> to vector<16xf32>
    %221 = vector.shape_cast %220 : vector<16xf32> to vector<16x1xf32>
    %222 = vector.broadcast %221 : vector<16x1xf32> to vector<16x128xf32>
    %223 = arith.subf %219, %222 : vector<16x128xf32>
    %224 = math.exp %223 : vector<16x128xf32>
    %cst_70 = arith.constant dense<0.000000e+00> : vector<16xf32>
    %225 = vector.multi_reduction <add>, %224, %cst_70 [1] : vector<16x128xf32> to vector<16xf32>
    %226 = vector.shape_cast %225 : vector<16xf32> to vector<16x1xf32>
    %227 = math.log %226 : vector<16x1xf32>
    %228 = arith.addf %227, %221 : vector<16x1xf32>
    %229 = vector.broadcast %213 : vector<16x1xi32> to vector<16x128xi32>
    %230 = arith.cmpi eq, %215, %229 : vector<16x128xi32>
    %cst_71 = arith.constant 0.000000e+00 : f32
    %231 = vector.broadcast %cst_71 : f32 to vector<16x128xf32>
    %232 = arith.select %230, %214, %231 : vector<16x128xi1>, vector<16x128xf32>
    %cst_72 = arith.constant dense<0.000000e+00> : vector<16xf32>
    %233 = vector.multi_reduction <add>, %232, %cst_72 [1] : vector<16x128xf32> to vector<16xf32>
    %234 = vector.shape_cast %233 : vector<16xf32> to vector<16x1xf32>
    %235 = vector.broadcast %3 : i32 to vector<16x1xi32>
    %236 = arith.addi %235, %4 : vector<16x1xi32>
    %c16_i32_73 = arith.constant 16 : i32
    %237 = vector.broadcast %c16_i32_73 : i32 to vector<16x1xi32>
    %238 = arith.cmpi slt, %236, %237 : vector<16x1xi32>
    %239 = arith.subf %228, %234 : vector<16x1xf32>
    %cst_74 = arith.constant 0.000000e+00 : f32
    %240 = vector.broadcast %cst_74 : f32 to vector<16x1xf32>
    %241 = arith.select %238, %239, %240 : vector<16x1xi1>, vector<16x1xf32>
    %c0_75 = arith.constant 0 : index
    %c0_76 = arith.constant 0 : index
    %242 = vector.load %arg5[%c0_75, %c0_76] : memref<1x1xf32, #tpu.memory_space<vmem>>, vector<1x1xf32>
    %cst_77 = arith.constant dense<0.000000e+00> : vector<1xf32>
    %243 = vector.multi_reduction <add>, %241, %cst_77 [0] : vector<16x1xf32> to vector<1xf32>
    %244 = vector.shape_cast %243 : vector<1xf32> to vector<1x1xf32>
    %245 = arith.addf %242, %244 : vector<1x1xf32>
    %c0_78 = arith.constant 0 : index
    %c0_79 = arith.constant 0 : index
    %246 = vector.load %arg5[%c0_78, %c0_79] : memref<1x1xf32, #tpu.memory_space<vmem>>, vector<1x1xf32>
    tpu.vector_store %arg5[%c0_78, %c0_79], %245 {strides = array<i32>} : memref<1x1xf32, #tpu.memory_space<vmem>>, vector<1x1xf32>,
    %c0_i32_80 = arith.constant 0 : i32
    %247 = arith.cmpi eq, %arg0, %c0_i32_80 : i32
    %248 = arith.extui %247 : i1 to i32
    %c0_i32_81 = arith.constant 0 : i32
    %249 = arith.cmpi ne, %248, %c0_i32_81 : i32
    scf.if %249 {
      %c0_82 = arith.constant 0 : index
      %c0_83 = arith.constant 0 : index
      %250 = vector.load %arg5[%c0_82, %c0_83] : memref<1x1xf32, #tpu.memory_space<vmem>>, vector<1x1xf32>
      %cst_84 = arith.constant 6.250000e-02 : f32
      %251 = vector.broadcast %cst_84 : f32 to vector<1x1xf32>
      %252 = arith.mulf %250, %251 : vector<1x1xf32>
      %c0_85 = arith.constant 0 : index
      %c0_86 = arith.constant 0 : index
      %253 = vector.load %arg5[%c0_85, %c0_86] : memref<1x1xf32, #tpu.memory_space<vmem>>, vector<1x1xf32>
      tpu.vector_store %arg5[%c0_85, %c0_86], %252 {strides = array<i32>} : memref<1x1xf32, #tpu.memory_space<vmem>>, vector<1x1xf32>,
    } else {
    }
    return
  }
  func.func @transform_0(%arg0: i32, %arg1: memref<16xi32, #tpu.memory_space<smem>>, %arg2: memref<16xi32, #tpu.memory_space<smem>>) -> (i32, i32) {
    %c0_i32 = arith.constant 0 : i32
    %c0_i32_0 = arith.constant 0 : i32
    %c0_i32_1 = arith.constant 0 : i32
    return %c0_i32, %c0_i32_0 : i32, i32
  }
  func.func @transform_1(%arg0: i32, %arg1: memref<16xi32, #tpu.memory_space<smem>>, %arg2: memref<16xi32, #tpu.memory_space<smem>>) -> (i32, i32) {
    %c0_i32 = arith.constant 0 : i32
    %c0_i32_0 = arith.constant 0 : i32
    return %arg0, %c0_i32 : i32, i32
  }
  func.func @transform_2(%arg0: i32, %arg1: memref<16xi32, #tpu.memory_space<smem>>, %arg2: memref<16xi32, #tpu.memory_space<smem>>) -> (i32, i32) {
    %c0_i32 = arith.constant 0 : i32
    %c0_i32_0 = arith.constant 0 : i32
    %c0_i32_1 = arith.constant 0 : i32
    return %c0_i32, %c0_i32_0 : i32, i32
  }
}

</mosaic_0001>

<llo_original>
// kernel: tpu_custom_call.1
$region0: #{tpu_custom_call.1}
  #allocation0 [shape = 'u32[]', space=smem, size = 0x4, offset = 0x4, fixed_abs, tag = 'smem constant byte address 0x4 - core index']
  #allocation1 [shape = 'u32[72,128]{1,0:T(1,128)}', space=vmem, size = 0x9000, scoped, tag = 'internal scratch']
  #allocation2 [shape = 's32[1]{0}', space=sflag, size = 0x4, scoped, tag = 'scoped memory for tpu_custom_call.1']
  #allocation3 [shape = 'u8[512]{0}', space=smem, size = 0x200, scoped, tag = 'prefetched SMEM operand 0']
  #allocation4 [shape = 'u8[512]{0}', space=smem, size = 0x200, scoped, tag = 'prefetched SMEM operand 1']
  %s0 = inlined_call_operand.hbm [shape: s32[16], index: 0, kind: input, shape index: {}]
  %s1 = inlined_call_operand.hbm [shape: s32[16], index: 1, kind: input, shape index: {}]
  %s2 = inlined_call_operand.hbm [shape: f32[64,128], index: 2, kind: input, shape index: {}]
  %s3 = inlined_call_operand.hbm [shape: f32[16,128], index: 3, kind: output, shape index: {0}]
  %s4 = inlined_call_operand.hbm [shape: f32[1,1], index: 4, kind: output, shape index: {1}]
  %5 = xla_tuple %s3, %s4
  %s6 = sld [smem:[#allocation0]]
  $region34: #{tpu_custom_call.1} parent=0
    _
  %s8 = ssub.s32 1, %s6
  %s9 = scalar_select 0, %s8, %s6
  %s11 = sshll.u32 %s0, 4
  %s12 = int_to_ptr.hbm [resolvable:$true] %s11
  %14 = dma.hbm_to_smem %s12, 16, [#allocation3], [#allocation2]
  %s16 = sshll.u32 %s1, 4
  %s17 = int_to_ptr.hbm [resolvable:$true] %s16
  %19 = dma.hbm_to_smem %s17, 16, [#allocation4], [#allocation2]
  %21 = dma.done [#allocation2], 32
  %22 = sfence
  $region1: #{tpu_custom_call.1} parent=0
    #allocation5 [shape = 'u8[32768]{0}', space=vmem, size = 0x8000, scoped, tag = 'input window, operand 2, single buffered']
    #allocation6 [shape = 's32[1]{0}', space=sflag, size = 0x4, scoped, tag = 'scoped memory for tpu_custom_call.1']
    #allocation7 [shape = 's32[1]{0}', space=sflag, size = 0x4, scoped, tag = 'scoped memory for tpu_custom_call.1']
    #allocation8 [shape = 'u8[8192]{0}', space=vmem, size = 0x2000, scoped, tag = 'output window, operand 0, single buffered']
    #allocation9 [shape = 'u8[512]{0}', space=vmem, size = 0x400, scoped, tag = 'output window, operand 1, single buffered']
    #allocation10 [shape = 's32[1]{0}', space=sflag, size = 0x4, scoped, tag = 'scoped memory for tpu_custom_call.1']
    %23 = vsyncpa [#allocation6], 0
    %24 = vsyncpa [#allocation7], 0
    %25 = vsyncpa [#allocation10], 0
    // Predicated region
    $region2: #{tpu_custom_call.1} parent=1 // pred_check
      _
    $region3: #{tpu_custom_call.1} parent=1 // pred_check_branch
      %27 = sbr.rel (0) target = $region5
    $region4: #{tpu_custom_call.1} parent=1 // pred_region
      %29 = vsyncadd [#allocation6], 0
      %s30 = sshll.u32 %s2, 4
      %s31 = int_to_ptr.hbm [resolvable:$true] %s30
      %s32 = sshll.u32 [#allocation5], 4
      %s33 = int_to_ptr.vmem [resolvable:$true] %s32
      %38 = dma.hbm_to_vmem [thread:$0]  %s31, 1024, %s33, [#allocation6], 128, 128, 8
    $region5: #{tpu_custom_call.1} parent=1 // pred_fallthru
      _
    // Predicated region
    $region6: #{tpu_custom_call.1} parent=1 // pred_check
      _
    $region7: #{tpu_custom_call.1} parent=1 // pred_check_branch
      %40 = sbr.rel (0) target = $region9
    $region8: #{tpu_custom_call.1} parent=1 // pred_region
      %42 = dma.done [#allocation6], 1024
    $region9: #{tpu_custom_call.1} parent=1 // pred_fallthru
      _
    %p43 = scmp.eq.s32.totalorder 0, 0
    // Predicated region
    $region10: #{tpu_custom_call.1} parent=1 // pred_check
      %p44 = pneg %p43
    $region11: #{tpu_custom_call.1} parent=1 // pred_check_branch
      %46 = sbr.rel (%p44) target = $region13
    $region12: #{tpu_custom_call.1} parent=1 // pred_region
      %vm47 = vcmask 0
      %48 = vst.msk [vmem:[#allocation9] sm:$0x1] %vm47, 0.0
    $region13: #{tpu_custom_call.1} parent=1 // pred_fallthru
      _
    %s49 = smul.u32 0, 16
    %v50 = vlaneseq
    %v51 = vshrl.u32 %v50, 7
    %v52 = vadd.s32 %v51, 8
    %s53 = sld [smem:[#allocation3 + %s49]]
    %s54 = scalar_lea.vmem [#allocation5], %s53
    %v55 = vld [vmem:[%s54] sm:$0x1]
    %56 = vst [vmem:[#allocation8] sm:$0x1] %v55
    %vm57 = vcmp.eq.s32.totalorder %v51, 0
    %vm58 = vcmp.eq.s32.totalorder %v52, 0
    %s59 = sld [smem:[#allocation4 + %s49]]
    %v60 = vstv %s59
    %v61 = vsel %vm57, %v60, 0
    %v62 = vsel %vm58, %v60, 0
    %s63 = sadd.s32 %s49, 1
    %s64 = sld [smem:[#allocation3 + %s63]]
    %s65 = scalar_lea.vmem [#allocation5], %s64
    %v66 = vld [vmem:[%s65] sm:$0x1]
    %67 = vst [vmem:[#allocation8 + $0x1] sm:$0x1] %v66
    %vm68 = vcmp.eq.s32.totalorder %v51, 1
    %vm69 = vcmp.eq.s32.totalorder %v52, 1
    %s70 = sld [smem:[#allocation4 + %s63]]
    %v71 = vstv %s70
    %v72 = vsel %vm68, %v71, %v61
    %v73 = vsel %vm69, %v71, %v62
    %s74 = sadd.s32 %s49, 2
    %s75 = sld [smem:[#allocation3 + %s74]]
    %s76 = scalar_lea.vmem [#allocation5], %s75
    %v77 = vld [vmem:[%s76] sm:$0x1]
    %78 = vst [vmem:[#allocation8 + $0x2] sm:$0x1] %v77
    %vm79 = vcmp.eq.s32.totalorder %v51, 2
    %vm80 = vcmp.eq.s32.totalorder %v52, 2
    %s81 = sld [smem:[#allocation4 + %s74]]
    %v82 = vstv %s81
    %v83 = vsel %vm79, %v82, %v72
    %v84 = vsel %vm80, %v82, %v73
    %s85 = sadd.s32 %s49, 3
    %s86 = sld [smem:[#allocation3 + %s85]]
    %s87 = scalar_lea.vmem [#allocation5], %s86
    %v88 = vld [vmem:[%s87] sm:$0x1]
    %89 = vst [vmem:[#allocation8 + $0x3] sm:$0x1] %v88
    %vm90 = vcmp.eq.s32.totalorder %v51, 3
    %vm91 = vcmp.eq.s32.totalorder %v52, 3
    %s92 = sld [smem:[#allocation4 + %s85]]
    %v93 = vstv %s92
    %v94 = vsel %vm90, %v93, %v83
    %v95 = vsel %vm91, %v93, %v84
    %s96 = sadd.s32 %s49, 4
    %s97 = sld [smem:[#allocation3 + %s96]]
    %s98 = scalar_lea.vmem [#allocation5], %s97
    %v99 = vld [vmem:[%s98] sm:$0x1]
    %100 = vst [vmem:[#allocation8 + $0x4] sm:$0x1] %v99
    %vm101 = vcmp.eq.s32.totalorder %v51, 4
    %vm102 = vcmp.eq.s32.totalorder %v52, 4
    %s103 = sld [smem:[#allocation4 + %s96]]
    %v104 = vstv %s103
    %v105 = vsel %vm101, %v104, %v94
    %v106 = vsel %vm102, %v104, %v95
    %s107 = sadd.s32 %s49, 5
    %s108 = sld [smem:[#allocation3 + %s107]]
    %s109 = scalar_lea.vmem [#allocation5], %s108
    %v110 = vld [vmem:[%s109] sm:$0x1]
    %111 = vst [vmem:[#allocation8 + $0x5] sm:$0x1] %v110
    %vm112 = vcmp.eq.s32.totalorder %v51, 5
    %vm113 = vcmp.eq.s32.totalorder %v52, 5
    %s114 = sld [smem:[#allocation4 + %s107]]
    %v115 = vstv %s114
    %v116 = vsel %vm112, %v115, %v105
    %v117 = vsel %vm113, %v115, %v106
    %s118 = sadd.s32 %s49, 6
    %s119 = sld [smem:[#allocation3 + %s118]]
    %s120 = scalar_lea.vmem [#allocation5], %s119
    %v121 = vld [vmem:[%s120] sm:$0x1]
    %122 = vst [vmem:[#allocation8 + $0x6] sm:$0x1] %v121
    %vm123 = vcmp.eq.s32.totalorder %v51, 6
    %vm124 = vcmp.eq.s32.totalorder %v52, 6
    %s125 = sld [smem:[#allocation4 + %s118]]
    %v126 = vstv %s125
    %v127 = vsel %vm123, %v126, %v116
    %v128 = vsel %vm124, %v126, %v117
    %s129 = sadd.s32 %s49, 7
    %s130 = sld [smem:[#allocation3 + %s129]]
    %s131 = scalar_lea.vmem [#allocation5], %s130
    %v132 = vld [vmem:[%s131] sm:$0x1]
    %133 = vst [vmem:[#allocation8 + $0x7] sm:$0x1] %v132
    %vm134 = vcmp.eq.s32.totalorder %v51, 7
    %vm135 = vcmp.eq.s32.totalorder %v52, 7
    %s136 = sld [smem:[#allocation4 + %s129]]
    %v137 = vstv %s136
    %v138 = vsel %vm134, %v137, %v127
    %v139 = vsel %vm135, %v137, %v128
    %s140 = sadd.s32 %s49, 8
    %s141 = sld [smem:[#allocation3 + %s140]]
    %s142 = scalar_lea.vmem [#allocation5], %s141
    %v143 = vld [vmem:[%s142] sm:$0x1]
    %144 = vst [vmem:[#allocation8 + $0x8] sm:$0x1] %v143
    %vm145 = vcmp.eq.s32.totalorder %v51, 8
    %vm146 = vcmp.eq.s32.totalorder %v52, 8
    %s147 = sld [smem:[#allocation4 + %s140]]
    %v148 = vstv %s147
    %v149 = vsel %vm145, %v148, %v138
    %v150 = vsel %vm146, %v148, %v139
    %s151 = sadd.s32 %s49, 9
    %s152 = sld [smem:[#allocation3 + %s151]]
    %s153 = scalar_lea.vmem [#allocation5], %s152
    %v154 = vld [vmem:[%s153] sm:$0x1]
    %155 = vst [vmem:[#allocation8 + $0x9] sm:$0x1] %v154
    %vm156 = vcmp.eq.s32.totalorder %v51, 9
    %vm157 = vcmp.eq.s32.totalorder %v52, 9
    %s158 = sld [smem:[#allocation4 + %s151]]
    %v159 = vstv %s158
    %v160 = vsel %vm156, %v159, %v149
    %v161 = vsel %vm157, %v159, %v150
    %s162 = sadd.s32 %s49, 10
    %s163 = sld [smem:[#allocation3 + %s162]]
    %s164 = scalar_lea.vmem [#allocation5], %s163
    %v165 = vld [vmem:[%s164] sm:$0x1]
    %166 = vst [vmem:[#allocation8 + $0xa] sm:$0x1] %v165
    %vm167 = vcmp.eq.s32.totalorder %v51, 10
    %vm168 = vcmp.eq.s32.totalorder %v52, 10
    %s169 = sld [smem:[#allocation4 + %s162]]
    %v170 = vstv %s169
    %v171 = vsel %vm167, %v170, %v160
    %v172 = vsel %vm168, %v170, %v161
    %s173 = sadd.s32 %s49, 11
    %s174 = sld [smem:[#allocation3 + %s173]]
    %s175 = scalar_lea.vmem [#allocation5], %s174
    %v176 = vld [vmem:[%s175] sm:$0x1]
    %177 = vst [vmem:[#allocation8 + $0xb] sm:$0x1] %v176
    %vm178 = vcmp.eq.s32.totalorder %v51, 11
    %vm179 = vcmp.eq.s32.totalorder %v52, 11
    %s180 = sld [smem:[#allocation4 + %s173]]
    %v181 = vstv %s180
    %v182 = vsel %vm178, %v181, %v171
    %v183 = vsel %vm179, %v181, %v172
    %s184 = sadd.s32 %s49, 12
    %s185 = sld [smem:[#allocation3 + %s184]]
    %s186 = scalar_lea.vmem [#allocation5], %s185
    %v187 = vld [vmem:[%s186] sm:$0x1]
    %188 = vst [vmem:[#allocation8 + $0xc] sm:$0x1] %v187
    %vm189 = vcmp.eq.s32.totalorder %v51, 12
    %vm190 = vcmp.eq.s32.totalorder %v52, 12
    %s191 = sld [smem:[#allocation4 + %s184]]
    %v192 = vstv %s191
    %v193 = vsel %vm189, %v192, %v182
    %v194 = vsel %vm190, %v192, %v183
    %s195 = sadd.s32 %s49, 13
    %s196 = sld [smem:[#allocation3 + %s195]]
    %s197 = scalar_lea.vmem [#allocation5], %s196
    %v198 = vld [vmem:[%s197] sm:$0x1]
    %199 = vst [vmem:[#allocation8 + $0xd] sm:$0x1] %v198
    %vm200 = vcmp.eq.s32.totalorder %v51, 13
    %vm201 = vcmp.eq.s32.totalorder %v52, 13
    %s202 = sld [smem:[#allocation4 + %s195]]
    %v203 = vstv %s202
    %v204 = vsel %vm200, %v203, %v193
    %v205 = vsel %vm201, %v203, %v194
    %s206 = sadd.s32 %s49, 14
    %s207 = sld [smem:[#allocation3 + %s206]]
    %s208 = scalar_lea.vmem [#allocation5], %s207
    %v209 = vld [vmem:[%s208] sm:$0x1]
    %210 = vst [vmem:[#allocation8 + $0xe] sm:$0x1] %v209
    %vm211 = vcmp.eq.s32.totalorder %v51, 14
    %vm212 = vcmp.eq.s32.totalorder %v52, 14
    %s213 = sld [smem:[#allocation4 + %s206]]
    %v214 = vstv %s213
    %v215 = vsel %vm211, %v214, %v204
    %v216 = vsel %vm212, %v214, %v205
    %s217 = sadd.s32 %s49, 15
    %s218 = sld [smem:[#allocation3 + %s217]]
    %s219 = scalar_lea.vmem [#allocation5], %s218
    %v220 = vld [vmem:[%s219] sm:$0x1]
    %221 = vst [vmem:[#allocation8 + $0xf] sm:$0x1] %v220
    %vm222 = vcmp.eq.s32.totalorder %v51, 15
    %vm223 = vcmp.eq.s32.totalorder %v52, 15
    %s224 = sld [smem:[#allocation4 + %s217]]
    %v225 = vstv %s224
    %v226 = vsel %vm222, %v225, %v215
    %v227 = vsel %vm223, %v225, %v216
    %v228 = vld [vmem:[#allocation8] sm:$0xff]
    %v229 = vld [vmem:[#allocation8 + $0x8] sm:$0xff]
    %v230 = vlaneseq
    %v231 = vand.u32 %v230, 127
    %vm232 = vcmp.lt.s32.totalorder %v231, 64
    %v233 = vsel %vm232, %v228, -1e+30
    %v234 = vsel %vm232, %v229, -1e+30
    %235 = vmax.xlane.f32.xlu0 %v233
    %v236 = vpop.xlane.xlu0 %235
    %237 = vmax.xlane.f32.xlu0 %v234
    %v238 = vpop.xlane.xlu0 %237
    %v239 = vsub.f32 %v233, %v236
    %v240 = vsub.f32 %v234, %v238
    %v241 = vmul.f32 %v239, 1.442695
    %v242 = vpow.pop %v241
    %v243 = vmul.f32 %v240, 1.442695
    %v244 = vpow.pop %v243
    %245 = vadd.xlane.f32.xlu0 %v242
    %v246 = vpop.xlane.xlu0 %245
    %247 = vadd.xlane.f32.xlu0 %v244
    %v248 = vpop.xlane.xlu0 %247
    %v249 = vlog2.pop %v246
    %v250 = vmul.f32 %v249, 0.6931472
    %v251 = vlog2.pop %v248
    %v252 = vmul.f32 %v251, 0.6931472
    %v253 = vadd.f32 %v250, %v236
    %v254 = vadd.f32 %v252, %v238
    %vm255 = vcmp.eq.s32.totalorder %v231, %v226
    %vm256 = vcmp.eq.s32.totalorder %v231, %v227
    %v257 = vsel %vm255, %v228, 0.0
    %v258 = vsel %vm256, %v229, 0.0
    %259 = vadd.xlane.f32.xlu0 %v257
    %v260 = vpop.xlane.xlu0 %259
    %261 = vadd.xlane.f32.xlu0 %v258
    %v262 = vpop.xlane.xlu0 %261
    %v263 = vstv %s49
    %v264 = vadd.s32 %v263, %v51
    %v265 = vadd.s32 %v263, %v52
    %vm266 = vcmp.lt.s32.totalorder %v264, 16
    %vm267 = vcmp.lt.s32.totalorder %v265, 16
    %v268 = vsub.f32 %v253, %v260
    %v269 = vsub.f32 %v254, %v262
    %v270 = vsel %vm266, %v268, 0.0
    %v271 = vsel %vm267, %v269, 0.0
    %v272 = vld [vmem:[#allocation9] sm:$0x1]
    %v273 = vadd.f32 %v270, %v271
    %v274 = vrot.slane %v273, 4
    %v275 = vadd.f32 %v273, %v274
    %v276 = vrot.slane %v275, 2
    %v277 = vadd.f32 %v275, %v276
    %v278 = vrot.slane %v277, 1
    %v279 = vadd.f32 %v277, %v278
    %v280 = vadd.f32 %v272, %v279
    %vm281 = vcmask 0
    %282 = vst.msk [vmem:[#allocation9] sm:$0x1] %vm281, %v280
    // Predicated region
    $region14: #{tpu_custom_call.1} parent=1 // pred_check
      %p283 = pneg %p43
    $region15: #{tpu_custom_call.1} parent=1 // pred_check_branch
      %285 = sbr.rel (%p283) target = $region17
    $region16: #{tpu_custom_call.1} parent=1 // pred_region
      %v286 = vld [vmem:[#allocation9] sm:$0x1]
      %v287 = vmul.f32 %v286, 0.0625
      %288 = vst.msk [vmem:[#allocation9] sm:$0x1] %vm281, %v287
    $region17: #{tpu_custom_call.1} parent=1 // pred_fallthru
      _
    // Predicated region
    $region18: #{tpu_custom_call.1} parent=1 // pred_check
      _
    $region19: #{tpu_custom_call.1} parent=1 // pred_check_branch
      %290 = sbr.rel (0) target = $region21
    $region20: #{tpu_custom_call.1} parent=1 // pred_region
      %292 = vsyncadd [#allocation7], 0
      %s293 = sshll.u32 [#allocation8], 4
      %s294 = int_to_ptr.vmem [resolvable:$true] %s293
      %s295 = sshll.u32 %s3, 4
      %s296 = int_to_ptr.hbm [resolvable:$true] %s295
      %301 = dma.vmem_to_hbm [thread:$0]  %s294, 256, %s296, [#allocation7], 128, 128, 8
    $region21: #{tpu_custom_call.1} parent=1 // pred_fallthru
      _
    // Predicated region
    $region22: #{tpu_custom_call.1} parent=1 // pred_check
      _
    $region23: #{tpu_custom_call.1} parent=1 // pred_check_branch
      %303 = sbr.rel (0) target = $region25
    $region24: #{tpu_custom_call.1} parent=1 // pred_region
      %305 = vsyncadd [#allocation10], 0
      %s307 = sshll.u32 [#allocation9], 4
      %s308 = int_to_ptr.vmem [resolvable:$true] %s307
      %s309 = sshll.u32 %s4, 4
      %s310 = int_to_ptr.hbm [resolvable:$true] %s309
      %312 = dma.vmem_to_hbm [thread:$0]  %s308, 16, %s310, [#allocation10]
    $region25: #{tpu_custom_call.1} parent=1 // pred_fallthru
      _
    // Predicated region
    $region26: #{tpu_custom_call.1} parent=1 // pred_check
      _
    $region27: #{tpu_custom_call.1} parent=1 // pred_check_branch
      %314 = sbr.rel (0) target = $region29
    $region28: #{tpu_custom_call.1} parent=1 // pred_region
      %316 = dma.done [#allocation7], 256
    $region29: #{tpu_custom_call.1} parent=1 // pred_fallthru
      _
    // Predicated region
    $region30: #{tpu_custom_call.1} parent=1 // pred_check
      _
    $region31: #{tpu_custom_call.1} parent=1 // pred_check_branch
      %318 = sbr.rel (0) target = $region33
    $region32: #{tpu_custom_call.1} parent=1 // pred_region
      %320 = dma.done [#allocation10], 16
    $region33: #{tpu_custom_call.1} parent=1 // pred_fallthru
      _
    %321 = vsyncpa [#allocation6], 1
    %322 = vsyncpa [#allocation7], 1
    %323 = vsyncpa [#allocation10], 1

</llo_original>
